<compile_context>
chip_gen: v6e
topology: v6e:2x2x1
jax: 0.10.0
libtpu: 0.0.40
codegen_flags: <defaults>
</compile_context>

<pallas_src>
import jax
import jax.numpy as jnp
from jax import lax
from jax.experimental import pallas as pl
from jax.experimental.pallas import tpu as pltpu

# ---- small, deterministic "config" (stand-in for network.config) ----
C_IN = 3
IMG_H = IMG_W = 16
PATCH = 4
N_PATCH = (IMG_H // PATCH) * (IMG_W // PATCH)     # 16 patches / image
K_PATCH = C_IN * PATCH * PATCH                    # 48 values / patch
C_CONV = 32
FEAT_DIM = 64            # config.resnet_out_feature_dim (small)
N_POSE = 6               # config.mano_pose_num (PCA pose coefficients)
N_BETAS = 10
N_COEFF = N_BETAS + N_POSE        # 16 blend coefficients
N_VERTS = 778                     # MANO right-hand vertex count
N_JOINTS = 21
LANE = 128
N_HEAD_OUT = 4 * LANE             # [jx | jy | jz | root aa(3)] lane-padded segments
B_ALIGN = 8                       # pad batch to fill vreg sublanes


def _mano_kernel(patches_ref, pool_ref, cam_ref,
                 conv_w_ref, conv_b_ref, fc_w_ref, fc_b_ref,
                 joint_w_ref, joint_b_ref,
                 out_ref):
    f32 = jnp.float32
    bf16 = jnp.bfloat16

    # ---- ResNet-style extractor: patchify-conv -> ReLU -> per-image GAP -> fc -> ReLU
    conv = jnp.dot(patches_ref[...], conv_w_ref[...], preferred_element_type=f32)
    conv = jnp.maximum(conv + conv_b_ref[...], 0.0)                      # (Bp*NP, C_CONV)
    pooled = jnp.dot(pool_ref[...], conv.astype(bf16),
                     preferred_element_type=f32)                         # (Bp, C_CONV)
    feat = jnp.dot(pooled.astype(bf16), fc_w_ref[...], preferred_element_type=f32)
    feat = jnp.maximum(feat + fc_b_ref[...], 0.0)                        # (Bp, FEAT_DIM)

    # ---- fused betas/theta heads + linear MANO blend + joint regressor,
    # constant-folded offline into ONE (FEAT, 512) weight:
    #   lanes [0:128)=joint_x  [128:256)=joint_y  [256:384)=joint_z  [384:387)=root aa
    # TODO(synk): full MANO LBS (per-joint Rodrigues kinematic chain + skinning
    # weights) is approximated by this linear blend + global root rotation;
    # vertices are not emitted because forward() discards them.
    head = jnp.dot(feat.astype(bf16), joint_w_ref[...],
                   preferred_element_type=f32) + joint_b_ref[...]        # (Bp, 512)
    jx = head[:, 0 * LANE:1 * LANE]
    jy = head[:, 1 * LANE:2 * LANE]
    jz = head[:, 2 * LANE:3 * LANE]
    rx = head[:, 3 * LANE + 0:3 * LANE + 1]                              # (Bp, 1)
    ry = head[:, 3 * LANE + 1:3 * LANE + 2]
    rz = head[:, 3 * LANE + 2:3 * LANE + 3]

    # ---- Rodrigues rotation by the predicted global root axis-angle
    s = rx * rx + ry * ry + rz * rz + 1e-8
    inv_angle = lax.rsqrt(s)                                             # EUP
    angle = s * inv_angle
    sa = jnp.sin(angle)
    ca = jnp.cos(angle)
    omc = 1.0 - ca
    ax = rx * inv_angle
    ay = ry * inv_angle
    az = rz * inv_angle
    dotp = ax * jx + ay * jy + az * jz
    cxv = ay * jz - az * jy
    cyv = az * jx - ax * jz
    czv = ax * jy - ay * jx
    jrx = jx * ca + cxv * sa + ax * dotp * omc
    jry = jy * ca + cyv * sa + ay * dotp * omc
    jrz = jz * ca + czv * sa + az * dotp * omc

    # ---- batch_project_xyz_to_uv: uv_h = K @ xyz ; uv = uv_h[:2] / uv_h[2]
    cam = cam_ref[...]                                                   # (Bp, 9) row-major K

    def kel(i, j):
        return cam[:, 3 * i + j:3 * i + j + 1]                           # (Bp, 1)

    uh = kel(0, 0) * jrx + kel(0, 1) * jry + kel(0, 2) * jrz
    vh = kel(1, 0) * jrx + kel(1, 1) * jry + kel(1, 2) * jrz
    zh = kel(2, 0) * jrx + kel(2, 1) * jry + kel(2, 2) * jrz
    # exact divide; sign-preserving guard (padding lanes / rows have z == 0)
    zh_safe = jnp.where(jnp.abs(zh) > 1e-6, zh,
                        jnp.where(zh >= 0.0, 1e-6, -1e-6))
    u = uh / zh_safe
    v = vh / zh_safe

    # ---- one merged, lane-dense output: rows [x, y, z, u, v], 128-lane padded
    out_ref[0, :, :] = jrx
    out_ref[1, :, :] = jry
    out_ref[2, :, :] = jrz
    out_ref[3, :, :] = u
    out_ref[4, :, :] = v


_VMEM = pl.BlockSpec(memory_space=pltpu.MemorySpace.VMEM)


def _patchify(img):
    # img: (B, C, H, W) NCHW  ->  (B*N_PATCH, C*P*P)   (stride-P "conv" im2col)
    b, c, h, w = img.shape
    x = img.reshape(b, c, h // PATCH, PATCH, w // PATCH, PATCH)
    x = x.transpose(0, 2, 4, 1, 3, 5)
    return x.reshape(b * N_PATCH, K_PATCH)


@jax.jit
def mano3d_handpose_forward(params, img, camera_intrinsic_matrix,
                            index_root_bone_length, kp_coord_xyz_root, pose_x0=None):
    # index_root_bone_length / kp_coord_xyz_root / pose_x0 are unused in the
    # reference forward() (match_mano_to_RHD is not called there).
    del index_root_bone_length, kp_coord_xyz_root, pose_x0
    b = img.shape[0]
    b_pad = ((b + B_ALIGN - 1) // B_ALIGN) * B_ALIGN

    img_f = img.astype(jnp.float32)
    if b_pad != b:
        img_f = jnp.pad(img_f, ((0, b_pad - b), (0, 0), (0, 0), (0, 0)))
    patches = _patchify(img_f).astype(jnp.bfloat16)                      # (Bp*NP, K_PATCH)
    # per-image global-average-pool expressed as a (Bp, Bp*NP) matmul
    # (built from static sizes -> constant-folded under jit)
    pool_w = (jnp.repeat(jnp.eye(b_pad, dtype=jnp.float32), N_PATCH, axis=1)
              / N_PATCH).astype(jnp.bfloat16)
    cam_flat = camera_intrinsic_matrix.astype(jnp.float32).reshape(b, 9)
    if b_pad != b:
        cam_flat = jnp.pad(cam_flat, ((0, b_pad - b), (0, 0)))

    out = pl.pallas_call(
        _mano_kernel,
        in_specs=[_VMEM] * 9,
        out_specs=_VMEM,
        out_shape=jax.ShapeDtypeStruct((5, b_pad, LANE), jnp.float32),
    )(patches, pool_w, cam_flat,
      params['conv_w'], params['conv_b'], params['fc_w'], params['fc_b'],
      params['joint_w'], params['joint_b'])

    joint21_3d = jnp.transpose(out[0:3, :b, :N_JOINTS], (1, 2, 0))       # (B, 21, 3)
    uv21 = jnp.transpose(out[3:5, :b, :N_JOINTS], (1, 2, 0))             # (B, 21, 2)
    diffusion_loss = jnp.zeros((), jnp.float32)
    refined_joint_coord = [joint21_3d, uv21, None]
    return refined_joint_coord, diffusion_loss, [None, None]


def init_params(key):
    ks = jax.random.split(key, 8)

    def rn(k, shape, scale):
        return (scale * jax.random.normal(k, shape)).astype(jnp.float32)

    conv_w = rn(ks[0], (K_PATCH, C_CONV), 0.1)
    fc_w = rn(ks[1], (C_CONV, FEAT_DIM), 0.1)
    # fused theta+betas head, columns [betas(10) | other_angles(6) | root aa(3)]
    head_w = rn(ks[2], (FEAT_DIM, N_COEFF + 3), 0.05)
    head_b = jnp.zeros((1, N_COEFF + 3), jnp.float32)

    # MANO-ish geometry: template hand ~4cm spread in x/y, ~0.5m in front of camera
    xy = rn(ks[4], (2, N_VERTS), 0.04)
    z = 0.5 + rn(ks[5], (1, N_VERTS), 0.02)
    vtempl = jnp.concatenate([xy, z], axis=0)                            # (3, N_VERTS)
    blend = rn(ks[6], (3, N_COEFF, N_VERTS), 0.005)                      # shapedirs ++ posedirs
    jreg = jnp.abs(jax.random.normal(ks[7], (N_JOINTS, N_VERTS))) + 1e-3
    jreg = jreg / jnp.sum(jreg, axis=1, keepdims=True)
    jreg_t = jnp.transpose(jreg)                                         # (N_VERTS, 21)

    # ---- offline constant fold (all f32): head -> linear blend -> joint regressor
    #   j[d] = (coeffs @ blend[d] + vtempl[d]) @ jreg_t
    #        = feat @ (head_w_coeff @ (blend[d] @ jreg_t))
    #          + head_b_coeff @ (blend[d] @ jreg_t) + vtempl[d] @ jreg_t
    blend_jreg = jnp.einsum('dcv,vj->dcj', blend, jreg_t)                # (3, 16, 21)
    vtempl_j = vtempl @ jreg_t                                           # (3, 21)
    jw = jnp.einsum('fc,dcj->dfj', head_w[:, :N_COEFF], blend_jreg)      # (3, FEAT, 21)
    jb = (jnp.einsum('oc,dcj->doj', head_b[:, :N_COEFF], blend_jreg)
          + vtempl_j[:, None, :])                                        # (3, 1, 21)

    # lane-aligned packing: [jx | jy | jz | root aa] in 128-lane segments
    joint_w = jnp.zeros((FEAT_DIM, N_HEAD_OUT), jnp.float32)
    joint_b = jnp.zeros((1, N_HEAD_OUT), jnp.float32)
    for d in range(3):
        joint_w = joint_w.at[:, d * LANE:d * LANE + N_JOINTS].set(jw[d])
        joint_b = joint_b.at[:, d * LANE:d * LANE + N_JOINTS].set(jb[d])
    joint_w = joint_w.at[:, 3 * LANE:3 * LANE + 3].set(head_w[:, N_COEFF:])
    joint_b = joint_b.at[:, 3 * LANE:3 * LANE + 3].set(head_b[:, N_COEFF:])

    return {
        'conv_w': conv_w.astype(jnp.bfloat16),
        'conv_b': jnp.zeros((1, C_CONV), jnp.float32),
        'fc_w': fc_w.astype(jnp.bfloat16),
        'fc_b': jnp.zeros((1, FEAT_DIM), jnp.float32),
        'joint_w': joint_w.astype(jnp.bfloat16),   # delta / angle weights only
        'joint_b': joint_b,                        # f32 bias carries absolute template joints
    }


if __name__ == "__main__":
    BATCH = 2
    key = jax.random.PRNGKey(0)
    k_img, _ = jax.random.split(key)
    img = jax.random.normal(k_img, (BATCH, C_IN, IMG_H, IMG_W), jnp.float32)
    fx = fy = 120.0
    cx = cy = IMG_W / 2.0
    cam_K = jnp.tile(
        jnp.array([[fx, 0.0, cx], [0.0, fy, cy], [0.0, 0.0, 1.0]], jnp.float32)[None],
        (BATCH, 1, 1))
    index_root_bone_length = jnp.ones((BATCH, 1), jnp.float32)
    kp_coord_xyz_root = jnp.zeros((BATCH, 3), jnp.float32)

    params = init_params(jax.random.PRNGKey(42))
    refined, diff_loss, extra = mano3d_handpose_forward(
        params, img, cam_K, index_root_bone_length, kp_coord_xyz_root)
    joint21_3d, uv21, _ = refined
    jax.block_until_ready((joint21_3d, uv21, diff_loss))
    assert joint21_3d.shape == (BATCH, N_JOINTS, 3)
    assert uv21.shape == (BATCH, N_JOINTS, 2)
    assert bool(jnp.all(jnp.isfinite(joint21_3d))) and bool(jnp.all(jnp.isfinite(uv21)))
    print("KERNEL_OK")
</pallas_src>

<mosaic_0001>
module attributes {stable_mosaic.version = 11 : i64} {
  func.func @_mano_kernel(%arg0: memref<128x48xbf16, #tpu.memory_space<vmem>>, %arg1: memref<8x128xbf16, #tpu.memory_space<vmem>>, %arg2: memref<8x9xf32, #tpu.memory_space<vmem>>, %arg3: memref<48x32xbf16, #tpu.memory_space<vmem>>, %arg4: memref<1x32xf32, #tpu.memory_space<vmem>>, %arg5: memref<32x64xbf16, #tpu.memory_space<vmem>>, %arg6: memref<1x64xf32, #tpu.memory_space<vmem>>, %arg7: memref<64x512xbf16, #tpu.memory_space<vmem>>, %arg8: memref<1x512xf32, #tpu.memory_space<vmem>>, %arg9: memref<5x8x128xf32, #tpu.memory_space<vmem>>) attributes {dimension_semantics = [], scalar_prefetch = 0 : i64, scratch_operands = 0 : i64, tpu.core_type = #tpu.core_type<tc>} {
    %c0 = arith.constant 0 : index
    %c0_0 = arith.constant 0 : index
    %0 = vector.load %arg0[%c0, %c0_0] : memref<128x48xbf16, #tpu.memory_space<vmem>>, vector<128x48xbf16>
    %c0_1 = arith.constant 0 : index
    %c0_2 = arith.constant 0 : index
    %1 = vector.load %arg3[%c0_1, %c0_2] : memref<48x32xbf16, #tpu.memory_space<vmem>>, vector<48x32xbf16>
    %cst = arith.constant dense<0.000000e+00> : vector<128x32xf32>
    %2 = tpu.matmul %0, %1, %cst {dimension_numbers = #tpu.dot_dimension_numbers<[1], [0], [0], [1], [0, 0, 1, 1], [], []>} : vector<128x48xbf16>, vector<48x32xbf16>, vector<128x32xf32> -> vector<128x32xf32>
    %c0_3 = arith.constant 0 : index
    %c0_4 = arith.constant 0 : index
    %3 = vector.load %arg4[%c0_3, %c0_4] : memref<1x32xf32, #tpu.memory_space<vmem>>, vector<1x32xf32>
    %4 = vector.broadcast %3 : vector<1x32xf32> to vector<128x32xf32>
    %5 = arith.addf %2, %4 : vector<128x32xf32>
    %cst_5 = arith.constant 0.000000e+00 : f32
    %6 = vector.broadcast %cst_5 : f32 to vector<128x32xf32>
    %7 = arith.maximumf %5, %6 : vector<128x32xf32>
    %c0_6 = arith.constant 0 : index
    %c0_7 = arith.constant 0 : index
    %8 = vector.load %arg1[%c0_6, %c0_7] : memref<8x128xbf16, #tpu.memory_space<vmem>>, vector<8x128xbf16>
    %9 = arith.truncf %7 : vector<128x32xf32> to vector<128x32xbf16>
    %cst_8 = arith.constant dense<0.000000e+00> : vector<8x32xf32>
    %10 = tpu.matmul %8, %9, %cst_8 {dimension_numbers = #tpu.dot_dimension_numbers<[1], [0], [0], [1], [0, 0, 1, 1], [], []>} : vector<8x128xbf16>, vector<128x32xbf16>, vector<8x32xf32> -> vector<8x32xf32>
    %11 = arith.truncf %10 : vector<8x32xf32> to vector<8x32xbf16>
    %c0_9 = arith.constant 0 : index
    %c0_10 = arith.constant 0 : index
    %12 = vector.load %arg5[%c0_9, %c0_10] : memref<32x64xbf16, #tpu.memory_space<vmem>>, vector<32x64xbf16>
    %cst_11 = arith.constant dense<0.000000e+00> : vector<8x64xf32>
    %13 = tpu.matmul %11, %12, %cst_11 {dimension_numbers = #tpu.dot_dimension_numbers<[1], [0], [0], [1], [0, 0, 1, 1], [], []>} : vector<8x32xbf16>, vector<32x64xbf16>, vector<8x64xf32> -> vector<8x64xf32>
    %c0_12 = arith.constant 0 : index
    %c0_13 = arith.constant 0 : index
    %14 = vector.load %arg6[%c0_12, %c0_13] : memref<1x64xf32, #tpu.memory_space<vmem>>, vector<1x64xf32>
    %15 = vector.broadcast %14 : vector<1x64xf32> to vector<8x64xf32>
    %16 = arith.addf %13, %15 : vector<8x64xf32>
    %cst_14 = arith.constant 0.000000e+00 : f32
    %17 = vector.broadcast %cst_14 : f32 to vector<8x64xf32>
    %18 = arith.maximumf %16, %17 : vector<8x64xf32>
    %19 = arith.truncf %18 : vector<8x64xf32> to vector<8x64xbf16>
    %c0_15 = arith.constant 0 : index
    %c0_16 = arith.constant 0 : index
    %20 = vector.load %arg7[%c0_15, %c0_16] : memref<64x512xbf16, #tpu.memory_space<vmem>>, vector<64x512xbf16>
    %cst_17 = arith.constant dense<0.000000e+00> : vector<8x512xf32>
    %21 = tpu.matmul %19, %20, %cst_17 {dimension_numbers = #tpu.dot_dimension_numbers<[1], [0], [0], [1], [0, 0, 1, 1], [], []>} : vector<8x64xbf16>, vector<64x512xbf16>, vector<8x512xf32> -> vector<8x512xf32>
    %c0_18 = arith.constant 0 : index
    %c0_19 = arith.constant 0 : index
    %22 = vector.load %arg8[%c0_18, %c0_19] : memref<1x512xf32, #tpu.memory_space<vmem>>, vector<1x512xf32>
    %23 = vector.broadcast %22 : vector<1x512xf32> to vector<8x512xf32>
    %24 = arith.addf %21, %23 : vector<8x512xf32>
    %25 = vector.extract_strided_slice %24 {offsets = [0, 0], sizes = [8, 128], strides = [1, 1]} : vector<8x512xf32> to vector<8x128xf32>
    %26 = vector.extract_strided_slice %24 {offsets = [0, 128], sizes = [8, 128], strides = [1, 1]} : vector<8x512xf32> to vector<8x128xf32>
    %27 = vector.extract_strided_slice %24 {offsets = [0, 256], sizes = [8, 128], strides = [1, 1]} : vector<8x512xf32> to vector<8x128xf32>
    %28 = vector.extract_strided_slice %24 {offsets = [0, 384], sizes = [8, 1], strides = [1, 1]} : vector<8x512xf32> to vector<8x1xf32>
    %29 = vector.extract_strided_slice %24 {offsets = [0, 385], sizes = [8, 1], strides = [1, 1]} : vector<8x512xf32> to vector<8x1xf32>
    %30 = vector.extract_strided_slice %24 {offsets = [0, 386], sizes = [8, 1], strides = [1, 1]} : vector<8x512xf32> to vector<8x1xf32>
    %31 = arith.mulf %28, %28 : vector<8x1xf32>
    %32 = arith.mulf %29, %29 : vector<8x1xf32>
    %33 = arith.addf %31, %32 : vector<8x1xf32>
    %34 = arith.mulf %30, %30 : vector<8x1xf32>
    %35 = arith.addf %33, %34 : vector<8x1xf32>
    %cst_20 = arith.constant 9.99999993E-9 : f32
    %36 = vector.broadcast %cst_20 : f32 to vector<8x1xf32>
    %37 = arith.addf %35, %36 : vector<8x1xf32>
    %38 = math.rsqrt %37 : vector<8x1xf32>
    %39 = arith.mulf %37, %38 : vector<8x1xf32>
    %40 = math.sin %39 : vector<8x1xf32>
    %41 = math.cos %39 : vector<8x1xf32>
    %cst_21 = arith.constant 1.000000e+00 : f32
    %42 = vector.broadcast %cst_21 : f32 to vector<8x1xf32>
    %43 = arith.subf %42, %41 : vector<8x1xf32>
    %44 = arith.mulf %28, %38 : vector<8x1xf32>
    %45 = arith.mulf %29, %38 : vector<8x1xf32>
    %46 = arith.mulf %30, %38 : vector<8x1xf32>
    %47 = vector.broadcast %44 : vector<8x1xf32> to vector<8x128xf32>
    %48 = arith.mulf %47, %25 : vector<8x128xf32>
    %49 = vector.broadcast %45 : vector<8x1xf32> to vector<8x128xf32>
    %50 = arith.mulf %49, %26 : vector<8x128xf32>
    %51 = arith.addf %48, %50 : vector<8x128xf32>
    %52 = vector.broadcast %46 : vector<8x1xf32> to vector<8x128xf32>
    %53 = arith.mulf %52, %27 : vector<8x128xf32>
    %54 = arith.addf %51, %53 : vector<8x128xf32>
    %55 = vector.broadcast %45 : vector<8x1xf32> to vector<8x128xf32>
    %56 = arith.mulf %55, %27 : vector<8x128xf32>
    %57 = vector.broadcast %46 : vector<8x1xf32> to vector<8x128xf32>
    %58 = arith.mulf %57, %26 : vector<8x128xf32>
    %59 = arith.subf %56, %58 : vector<8x128xf32>
    %60 = vector.broadcast %46 : vector<8x1xf32> to vector<8x128xf32>
    %61 = arith.mulf %60, %25 : vector<8x128xf32>
    %62 = vector.broadcast %44 : vector<8x1xf32> to vector<8x128xf32>
    %63 = arith.mulf %62, %27 : vector<8x128xf32>
    %64 = arith.subf %61, %63 : vector<8x128xf32>
    %65 = vector.broadcast %44 : vector<8x1xf32> to vector<8x128xf32>
    %66 = arith.mulf %65, %26 : vector<8x128xf32>
    %67 = vector.broadcast %45 : vector<8x1xf32> to vector<8x128xf32>
    %68 = arith.mulf %67, %25 : vector<8x128xf32>
    %69 = arith.subf %66, %68 : vector<8x128xf32>
    %70 = vector.broadcast %41 : vector<8x1xf32> to vector<8x128xf32>
    %71 = arith.mulf %25, %70 : vector<8x128xf32>
    %72 = vector.broadcast %40 : vector<8x1xf32> to vector<8x128xf32>
    %73 = arith.mulf %59, %72 : vector<8x128xf32>
    %74 = arith.addf %71, %73 : vector<8x128xf32>
    %75 = vector.broadcast %44 : vector<8x1xf32> to vector<8x128xf32>
    %76 = arith.mulf %75, %54 : vector<8x128xf32>
    %77 = vector.broadcast %43 : vector<8x1xf32> to vector<8x128xf32>
    %78 = arith.mulf %76, %77 : vector<8x128xf32>
    %79 = arith.addf %74, %78 : vector<8x128xf32>
    %80 = vector.broadcast %41 : vector<8x1xf32> to vector<8x128xf32>
    %81 = arith.mulf %26, %80 : vector<8x128xf32>
    %82 = vector.broadcast %40 : vector<8x1xf32> to vector<8x128xf32>
    %83 = arith.mulf %64, %82 : vector<8x128xf32>
    %84 = arith.addf %81, %83 : vector<8x128xf32>
    %85 = vector.broadcast %45 : vector<8x1xf32> to vector<8x128xf32>
    %86 = arith.mulf %85, %54 : vector<8x128xf32>
    %87 = vector.broadcast %43 : vector<8x1xf32> to vector<8x128xf32>
    %88 = arith.mulf %86, %87 : vector<8x128xf32>
    %89 = arith.addf %84, %88 : vector<8x128xf32>
    %90 = vector.broadcast %41 : vector<8x1xf32> to vector<8x128xf32>
    %91 = arith.mulf %27, %90 : vector<8x128xf32>
    %92 = vector.broadcast %40 : vector<8x1xf32> to vector<8x128xf32>
    %93 = arith.mulf %69, %92 : vector<8x128xf32>
    %94 = arith.addf %91, %93 : vector<8x128xf32>
    %95 = vector.broadcast %46 : vector<8x1xf32> to vector<8x128xf32>
    %96 = arith.mulf %95, %54 : vector<8x128xf32>
    %97 = vector.broadcast %43 : vector<8x1xf32> to vector<8x128xf32>
    %98 = arith.mulf %96, %97 : vector<8x128xf32>
    %99 = arith.addf %94, %98 : vector<8x128xf32>
    %c0_22 = arith.constant 0 : index
    %c0_23 = arith.constant 0 : index
    %100 = vector.load %arg2[%c0_22, %c0_23] : memref<8x9xf32, #tpu.memory_space<vmem>>, vector<8x9xf32>
    %101 = vector.extract_strided_slice %100 {offsets = [0, 0], sizes = [8, 1], strides = [1, 1]} : vector<8x9xf32> to vector<8x1xf32>
    %102 = vector.broadcast %101 : vector<8x1xf32> to vector<8x128xf32>
    %103 = arith.mulf %102, %79 : vector<8x128xf32>
    %104 = vector.extract_strided_slice %100 {offsets = [0, 1], sizes = [8, 1], strides = [1, 1]} : vector<8x9xf32> to vector<8x1xf32>
    %105 = vector.broadcast %104 : vector<8x1xf32> to vector<8x128xf32>
    %106 = arith.mulf %105, %89 : vector<8x128xf32>
    %107 = arith.addf %103, %106 : vector<8x128xf32>
    %108 = vector.extract_strided_slice %100 {offsets = [0, 2], sizes = [8, 1], strides = [1, 1]} : vector<8x9xf32> to vector<8x1xf32>
    %109 = vector.broadcast %108 : vector<8x1xf32> to vector<8x128xf32>
    %110 = arith.mulf %109, %99 : vector<8x128xf32>
    %111 = arith.addf %107, %110 : vector<8x128xf32>
    %112 = vector.extract_strided_slice %100 {offsets = [0, 3], sizes = [8, 1], strides = [1, 1]} : vector<8x9xf32> to vector<8x1xf32>
    %113 = vector.broadcast %112 : vector<8x1xf32> to vector<8x128xf32>
    %114 = arith.mulf %113, %79 : vector<8x128xf32>
    %115 = vector.extract_strided_slice %100 {offsets = [0, 4], sizes = [8, 1], strides = [1, 1]} : vector<8x9xf32> to vector<8x1xf32>
    %116 = vector.broadcast %115 : vector<8x1xf32> to vector<8x128xf32>
    %117 = arith.mulf %116, %89 : vector<8x128xf32>
    %118 = arith.addf %114, %117 : vector<8x128xf32>
    %119 = vector.extract_strided_slice %100 {offsets = [0, 5], sizes = [8, 1], strides = [1, 1]} : vector<8x9xf32> to vector<8x1xf32>
    %120 = vector.broadcast %119 : vector<8x1xf32> to vector<8x128xf32>
    %121 = arith.mulf %120, %99 : vector<8x128xf32>
    %122 = arith.addf %118, %121 : vector<8x128xf32>
    %123 = vector.extract_strided_slice %100 {offsets = [0, 6], sizes = [8, 1], strides = [1, 1]} : vector<8x9xf32> to vector<8x1xf32>
    %124 = vector.broadcast %123 : vector<8x1xf32> to vector<8x128xf32>
    %125 = arith.mulf %124, %79 : vector<8x128xf32>
    %126 = vector.extract_strided_slice %100 {offsets = [0, 7], sizes = [8, 1], strides = [1, 1]} : vector<8x9xf32> to vector<8x1xf32>
    %127 = vector.broadcast %126 : vector<8x1xf32> to vector<8x128xf32>
    %128 = arith.mulf %127, %89 : vector<8x128xf32>
    %129 = arith.addf %125, %128 : vector<8x128xf32>
    %130 = vector.extract_strided_slice %100 {offsets = [0, 8], sizes = [8, 1], strides = [1, 1]} : vector<8x9xf32> to vector<8x1xf32>
    %131 = vector.broadcast %130 : vector<8x1xf32> to vector<8x128xf32>
    %132 = arith.mulf %131, %99 : vector<8x128xf32>
    %133 = arith.addf %129, %132 : vector<8x128xf32>
    %134 = math.absf %133 : vector<8x128xf32>
    %cst_24 = arith.constant 9.99999997E-7 : f32
    %135 = vector.broadcast %cst_24 : f32 to vector<8x128xf32>
    %136 = arith.cmpf ogt, %134, %135 : vector<8x128xf32>
    %cst_25 = arith.constant 0.000000e+00 : f32
    %137 = vector.broadcast %cst_25 : f32 to vector<8x128xf32>
    %138 = arith.cmpf oge, %133, %137 : vector<8x128xf32>
    %cst_26 = arith.constant 9.99999997E-7 : f32
    %cst_27 = arith.constant -9.99999997E-7 : f32
    %139 = vector.broadcast %cst_26 : f32 to vector<8x128xf32>
    %140 = vector.broadcast %cst_27 : f32 to vector<8x128xf32>
    %141 = arith.select %138, %139, %140 : vector<8x128xi1>, vector<8x128xf32>
    %142 = arith.select %136, %133, %141 : vector<8x128xi1>, vector<8x128xf32>
    %143 = arith.divf %111, %142 : vector<8x128xf32>
    %144 = arith.divf %122, %142 : vector<8x128xf32>
    %c0_28 = arith.constant 0 : index
    %c0_29 = arith.constant 0 : index
    %c0_30 = arith.constant 0 : index
    %145 = vector.load %arg9[%c0_28, %c0_29, %c0_30] : memref<5x8x128xf32, #tpu.memory_space<vmem>>, vector<1x8x128xf32>
    %146 = vector.shape_cast %145 : vector<1x8x128xf32> to vector<8x128xf32>
    %147 = vector.shape_cast %79 : vector<8x128xf32> to vector<1x8x128xf32>
    tpu.vector_store %arg9[%c0_28, %c0_29, %c0_30], %147 {strides = array<i32>} : memref<5x8x128xf32, #tpu.memory_space<vmem>>, vector<1x8x128xf32>,
    %c1 = arith.constant 1 : index
    %c0_31 = arith.constant 0 : index
    %c0_32 = arith.constant 0 : index
    %148 = vector.load %arg9[%c1, %c0_31, %c0_32] : memref<5x8x128xf32, #tpu.memory_space<vmem>>, vector<1x8x128xf32>
    %149 = vector.shape_cast %148 : vector<1x8x128xf32> to vector<8x128xf32>
    %150 = vector.shape_cast %89 : vector<8x128xf32> to vector<1x8x128xf32>
    tpu.vector_store %arg9[%c1, %c0_31, %c0_32], %150 {strides = array<i32>} : memref<5x8x128xf32, #tpu.memory_space<vmem>>, vector<1x8x128xf32>,
    %c2 = arith.constant 2 : index
    %c0_33 = arith.constant 0 : index
    %c0_34 = arith.constant 0 : index
    %151 = vector.load %arg9[%c2, %c0_33, %c0_34] : memref<5x8x128xf32, #tpu.memory_space<vmem>>, vector<1x8x128xf32>
    %152 = vector.shape_cast %151 : vector<1x8x128xf32> to vector<8x128xf32>
    %153 = vector.shape_cast %99 : vector<8x128xf32> to vector<1x8x128xf32>
    tpu.vector_store %arg9[%c2, %c0_33, %c0_34], %153 {strides = array<i32>} : memref<5x8x128xf32, #tpu.memory_space<vmem>>, vector<1x8x128xf32>,
    %c3 = arith.constant 3 : index
    %c0_35 = arith.constant 0 : index
    %c0_36 = arith.constant 0 : index
    %154 = vector.load %arg9[%c3, %c0_35, %c0_36] : memref<5x8x128xf32, #tpu.memory_space<vmem>>, vector<1x8x128xf32>
    %155 = vector.shape_cast %154 : vector<1x8x128xf32> to vector<8x128xf32>
    %156 = vector.shape_cast %143 : vector<8x128xf32> to vector<1x8x128xf32>
    tpu.vector_store %arg9[%c3, %c0_35, %c0_36], %156 {strides = array<i32>} : memref<5x8x128xf32, #tpu.memory_space<vmem>>, vector<1x8x128xf32>,
    %c4 = arith.constant 4 : index
    %c0_37 = arith.constant 0 : index
    %c0_38 = arith.constant 0 : index
    %157 = vector.load %arg9[%c4, %c0_37, %c0_38] : memref<5x8x128xf32, #tpu.memory_space<vmem>>, vector<1x8x128xf32>
    %158 = vector.shape_cast %157 : vector<1x8x128xf32> to vector<8x128xf32>
    %159 = vector.shape_cast %144 : vector<8x128xf32> to vector<1x8x128xf32>
    tpu.vector_store %arg9[%c4, %c0_37, %c0_38], %159 {strides = array<i32>} : memref<5x8x128xf32, #tpu.memory_space<vmem>>, vector<1x8x128xf32>,
    return
  }
}

</mosaic_0001>

<llo_original>
// kernel: mano3d_handpose_forward.1
$region0: #{mano3d_handpose_forward.1}
  #allocation0 [shape = 'u32[]', space=smem, size = 0x4, offset = 0x4, fixed_abs, tag = 'smem constant byte address 0x4 - core index']
  #allocation1 [shape = 'u32[144,128]{1,0:T(1,128)}', space=vmem, size = 0x12000, scoped, tag = 'internal scratch']
  %s0 = inlined_call_operand.vmem [shape: bf16[128,48], index: 0, kind: input, shape index: {}]
  %s1 = inlined_call_operand.vmem [shape: bf16[8,128], index: 1, kind: input, shape index: {}]
  %s2 = inlined_call_operand.vmem [shape: f32[8,9], index: 2, kind: input, shape index: {}]
  %s3 = inlined_call_operand.vmem [shape: bf16[48,32], index: 3, kind: input, shape index: {}]
  %s4 = inlined_call_operand.vmem [shape: f32[1,32], index: 4, kind: input, shape index: {}]
  %s5 = inlined_call_operand.vmem [shape: bf16[32,64], index: 5, kind: input, shape index: {}]
  %s6 = inlined_call_operand.vmem [shape: f32[1,64], index: 6, kind: input, shape index: {}]
  %s7 = inlined_call_operand.vmem [shape: bf16[64,512], index: 7, kind: input, shape index: {}]
  %s8 = inlined_call_operand.vmem [shape: f32[1,512], index: 8, kind: input, shape index: {}]
  %s9 = inlined_call_operand.vmem [shape: f32[5,8,128], index: 9, kind: output, shape index: {}]
  %s10 = sld [smem:[#allocation0]]
  $region46: #{mano3d_handpose_forward.1} parent=0
    _
  %s12 = ssub.s32 1, %s10
  %s13 = scalar_select 0, %s12, %s10
  // Predicated region
  $region2: #{mano3d_handpose_forward.1} parent=0 // pred_check
    _
  $region3: #{mano3d_handpose_forward.1} parent=0 // pred_check_branch
    %15 = sbr.rel (0) target = $region5
  $region4: #{mano3d_handpose_forward.1} parent=0 // pred_region
    _
  $region5: #{mano3d_handpose_forward.1} parent=0 // pred_fallthru
    _
  // Predicated region
  $region6: #{mano3d_handpose_forward.1} parent=0 // pred_check
    _
  $region7: #{mano3d_handpose_forward.1} parent=0 // pred_check_branch
    %17 = sbr.rel (0) target = $region9
  $region8: #{mano3d_handpose_forward.1} parent=0 // pred_region
    _
  $region9: #{mano3d_handpose_forward.1} parent=0 // pred_fallthru
    _
  // Predicated region
  $region10: #{mano3d_handpose_forward.1} parent=0 // pred_check
    _
  $region11: #{mano3d_handpose_forward.1} parent=0 // pred_check_branch
    %19 = sbr.rel (0) target = $region13
  $region12: #{mano3d_handpose_forward.1} parent=0 // pred_region
    _
  $region13: #{mano3d_handpose_forward.1} parent=0 // pred_fallthru
    _
  // Predicated region
  $region14: #{mano3d_handpose_forward.1} parent=0 // pred_check
    _
  $region15: #{mano3d_handpose_forward.1} parent=0 // pred_check_branch
    %21 = sbr.rel (0) target = $region17
  $region16: #{mano3d_handpose_forward.1} parent=0 // pred_region
    _
  $region17: #{mano3d_handpose_forward.1} parent=0 // pred_fallthru
    _
  // Predicated region
  $region18: #{mano3d_handpose_forward.1} parent=0 // pred_check
    _
  $region19: #{mano3d_handpose_forward.1} parent=0 // pred_check_branch
    %23 = sbr.rel (0) target = $region21
  $region20: #{mano3d_handpose_forward.1} parent=0 // pred_region
    _
  $region21: #{mano3d_handpose_forward.1} parent=0 // pred_fallthru
    _
  // Predicated region
  $region22: #{mano3d_handpose_forward.1} parent=0 // pred_check
    _
  $region23: #{mano3d_handpose_forward.1} parent=0 // pred_check_branch
    %25 = sbr.rel (0) target = $region25
  $region24: #{mano3d_handpose_forward.1} parent=0 // pred_region
    _
  $region25: #{mano3d_handpose_forward.1} parent=0 // pred_fallthru
    _
  // Predicated region
  $region26: #{mano3d_handpose_forward.1} parent=0 // pred_check
    _
  $region27: #{mano3d_handpose_forward.1} parent=0 // pred_check_branch
    %27 = sbr.rel (0) target = $region29
  $region28: #{mano3d_handpose_forward.1} parent=0 // pred_region
    _
  $region29: #{mano3d_handpose_forward.1} parent=0 // pred_fallthru
    _
  // Predicated region
  $region30: #{mano3d_handpose_forward.1} parent=0 // pred_check
    _
  $region31: #{mano3d_handpose_forward.1} parent=0 // pred_check_branch
    %29 = sbr.rel (0) target = $region33
  $region32: #{mano3d_handpose_forward.1} parent=0 // pred_region
    _
  $region33: #{mano3d_handpose_forward.1} parent=0 // pred_fallthru
    _
  // Predicated region
  $region34: #{mano3d_handpose_forward.1} parent=0 // pred_check
    _
  $region35: #{mano3d_handpose_forward.1} parent=0 // pred_check_branch
    %31 = sbr.rel (0) target = $region37
  $region36: #{mano3d_handpose_forward.1} parent=0 // pred_region
    _
  $region37: #{mano3d_handpose_forward.1} parent=0 // pred_fallthru
    _
  %v33 = vld [vmem:[%s0] sm:$0xf]
  %v34 = vld [vmem:[%s0 + $0x4] sm:$0xf]
  %v35 = vld [vmem:[%s0 + $0x8] sm:$0xf]
  %v36 = vld [vmem:[%s0 + $0xc] sm:$0xf]
  %v37 = vld [vmem:[%s0 + $0x10] sm:$0xf]
  %v38 = vld [vmem:[%s0 + $0x14] sm:$0xf]
  %v39 = vld [vmem:[%s0 + $0x18] sm:$0xf]
  %v40 = vld [vmem:[%s0 + $0x1c] sm:$0xf]
  %v41 = vld [vmem:[%s0 + $0x20] sm:$0xf]
  %v42 = vld [vmem:[%s0 + $0x24] sm:$0xf]
  %v43 = vld [vmem:[%s0 + $0x28] sm:$0xf]
  %v44 = vld [vmem:[%s0 + $0x2c] sm:$0xf]
  %v45 = vld [vmem:[%s0 + $0x30] sm:$0xf]
  %v46 = vld [vmem:[%s0 + $0x34] sm:$0xf]
  %v47 = vld [vmem:[%s0 + $0x38] sm:$0xf]
  %v48 = vld [vmem:[%s0 + $0x3c] sm:$0xf]
  %v49 = vld [vmem:[%s3] sm:$0xf]
  %v50 = vld [vmem:[%s3 + $0x4] sm:$0xf]
  %v51 = vld [vmem:[%s3 + $0x8] sm:$0xf]
  %v52 = vld [vmem:[%s3 + $0xc] sm:$0xf]
  %v53 = vld [vmem:[%s3 + $0x10] sm:$0xf]
  %v54 = vld [vmem:[%s3 + $0x14] sm:$0xf]
  %v55 = vld [vmem:[%s4] sm:$0x1]
  %v57 = vlaneseq
  %v58 = vshrl.u32 %v57, 7
  %v59 = vsub.s32 0, %v58
  %v60 = vrot.slane %v55, %v59
  %v78 = vunpack.c.l.b16 %v33
  %v79 = vunpack.c.l.b16 %v34
  %v80 = vunpack.c.l.b16 %v35
  %v81 = vunpack.c.l.b16 %v36
  %v82 = vunpack.c.l.b16 %v37
  %v83 = vunpack.c.l.b16 %v38
  %v84 = vunpack.c.l.b16 %v39
  %v85 = vunpack.c.l.b16 %v40
  %v86 = vunpack.c.l.b16 %v41
  %v87 = vunpack.c.l.b16 %v42
  %v88 = vunpack.c.l.b16 %v43
  %v89 = vunpack.c.l.b16 %v44
  %v90 = vunpack.c.l.b16 %v45
  %v91 = vunpack.c.l.b16 %v46
  %v92 = vunpack.c.l.b16 %v47
  %v93 = vunpack.c.l.b16 %v48
  %v94 = vpack.c.b16 %v79, %v78
  %v95 = vpack.c.b16 %v81, %v80
  %v96 = vpack.c.b16 %v83, %v82
  %v97 = vpack.c.b16 %v85, %v84
  %v98 = vpack.c.b16 %v87, %v86
  %v99 = vpack.c.b16 %v89, %v88
  %v100 = vpack.c.b16 %v91, %v90
  %v101 = vpack.c.b16 %v93, %v92
  %v108 = vunpack.c.l.b16 %v49
  %v109 = vunpack.c.l.b16 %v50
  %v110 = vunpack.c.l.b16 %v51
  %v111 = vunpack.c.l.b16 %v52
  %v112 = vunpack.c.l.b16 %v53
  %v113 = vunpack.c.l.b16 %v54
  %v114 = vpack.c.b16 %v109, %v108
  %v115 = vpack.c.b16 %v111, %v110
  %v116 = vpack.c.b16 %v113, %v112
  %vm120 = vcmask 392192
  %v122 = vsel %vm120, %v94, 0
  %v125 = vsel %vm120, %v95, 0
  %v128 = vsel %vm120, %v96, 0
  %v131 = vsel %vm120, %v97, 0
  %v134 = vsel %vm120, %v98, 0
  %v137 = vsel %vm120, %v99, 0
  %v140 = vsel %vm120, %v100, 0
  %v143 = vsel %vm120, %v101, 0
  %145 = vmatprep.subr.bf16.mxu0 0
  %146 = vmatpush1.bf16.msra.mxu0 0
  %147 = vmatprep.subr.bf16.mxu0 0
  %148 = vmatpush1.bf16.msra.mxu0 0
  %149 = vmatprep.subr.bf16.mxu0 0
  %150 = vmatpush1.bf16.msra.mxu0 0
  %151 = vmatprep.subr.bf16.mxu0 0
  %152 = vmatpush1.bf16.msra.mxu0 0
  %153 = vmatprep.subr.bf16.mxu0 0
  %154 = vmatpush1.bf16.msra.mxu0 0
  %155 = vmatprep.subr.bf16.mxu0 0
  %156 = vmatpush1.bf16.msra.mxu0 %v116
  %157 = vmatprep.subr.bf16.mxu0 0
  %158 = vmatpush1.bf16.msra.mxu0 %v115
  %159 = vmatprep.subr.bf16.mxu0 0
  %160 = vmatpush1.bf16.msra.mxu0 %v114
  %161 = vmatprep.subr.bf16.mxu0 0
  %162 = vmatpush2.bf16.msra.mxu0 0
  %163 = vmatprep.subr.bf16.mxu0 0
  %164 = vmatpush2.bf16.msra.mxu0 0
  %165 = vmatprep.subr.bf16.mxu0 0
  %166 = vmatpush2.bf16.msra.mxu0 0
  %167 = vmatprep.subr.bf16.mxu0 0
  %168 = vmatpush2.bf16.msra.mxu0 0
  %169 = vmatprep.subr.bf16.mxu0 0
  %170 = vmatpush2.bf16.msra.mxu0 0
  %171 = vmatprep.subr.bf16.mxu0 0
  %172 = vmatpush2.bf16.msra.mxu0 0
  %173 = vmatprep.subr.bf16.mxu0 0
  %174 = vmatpush2.bf16.msra.mxu0 0
  %175 = vmatprep.subr.bf16.mxu0 0
  %176 = vmatpush2.bf16.msra.mxu0 0
  %177 = vmatprep.mubr.bf16.mxu0 0
  %178 = vmatmul.mubr.bf16.gmra.mxu0 %v122
  %v179 = vpop.f32.mrf.mxu0
  %v180 = vadd.f32 %v60, %v179
  %v181 = vpop.f32.mrf.mxu0
  %v182 = vpop.f32.mrf.mxu0
  %v183 = vadd.f32 %v60, %v182
  %v184 = vpop.f32.mrf.mxu0
  %185 = vmatprep.mubr.bf16.mxu0 0
  %186 = vmatmul.mubr.bf16.gmra.mxu0 %v125
  %v187 = vpop.f32.mrf.mxu0
  %v188 = vadd.f32 %v60, %v187
  %v189 = vpop.f32.mrf.mxu0
  %v190 = vpop.f32.mrf.mxu0
  %v191 = vadd.f32 %v60, %v190
  %v192 = vpop.f32.mrf.mxu0
  %193 = vmatprep.mubr.bf16.mxu0 0
  %194 = vmatmul.mubr.bf16.gmra.mxu0 %v128
  %v195 = vpop.f32.mrf.mxu0
  %v196 = vadd.f32 %v60, %v195
  %v197 = vpop.f32.mrf.mxu0
  %v198 = vpop.f32.mrf.mxu0
  %v199 = vadd.f32 %v60, %v198
  %v200 = vpop.f32.mrf.mxu0
  %201 = vmatprep.mubr.bf16.mxu0 0
  %202 = vmatmul.mubr.bf16.gmra.mxu0 %v131
  %v203 = vpop.f32.mrf.mxu0
  %v204 = vadd.f32 %v60, %v203
  %v205 = vpop.f32.mrf.mxu0
  %v206 = vpop.f32.mrf.mxu0
  %v207 = vadd.f32 %v60, %v206
  %v208 = vpop.f32.mrf.mxu0
  %209 = vmatprep.mubr.bf16.mxu0 0
  %210 = vmatmul.mubr.bf16.gmra.mxu0 %v134
  %v211 = vpop.f32.mrf.mxu0
  %v212 = vadd.f32 %v60, %v211
  %v213 = vpop.f32.mrf.mxu0
  %v214 = vpop.f32.mrf.mxu0
  %v215 = vadd.f32 %v60, %v214
  %v216 = vpop.f32.mrf.mxu0
  %217 = vmatprep.mubr.bf16.mxu0 0
  %218 = vmatmul.mubr.bf16.gmra.mxu0 %v137
  %v219 = vpop.f32.mrf.mxu0
  %v220 = vadd.f32 %v60, %v219
  %v221 = vpop.f32.mrf.mxu0
  %v222 = vpop.f32.mrf.mxu0
  %v223 = vadd.f32 %v60, %v222
  %v224 = vpop.f32.mrf.mxu0
  %225 = vmatprep.mubr.bf16.mxu0 0
  %226 = vmatmul.mubr.bf16.gmra.mxu0 %v140
  %v227 = vpop.f32.mrf.mxu0
  %v228 = vadd.f32 %v60, %v227
  %v229 = vpop.f32.mrf.mxu0
  %v230 = vpop.f32.mrf.mxu0
  %v231 = vadd.f32 %v60, %v230
  %v232 = vpop.f32.mrf.mxu0
  %233 = vmatprep.mubr.bf16.mxu0 0
  %234 = vmatmul.mubr.bf16.gmra.mxu0 %v143
  %v235 = vpop.f32.mrf.mxu0
  %v236 = vadd.f32 %v60, %v235
  %v237 = vpop.f32.mrf.mxu0
  %v238 = vpop.f32.mrf.mxu0
  %v239 = vadd.f32 %v60, %v238
  %v240 = vpop.f32.mrf.mxu0
  %241 = vdwg.mxu0
  %v242 = vmax.f32 %v180, 0.0
  %v243 = vmax.f32 %v183, 0.0
  %v244 = vmax.f32 %v188, 0.0
  %v245 = vmax.f32 %v191, 0.0
  %v246 = vmax.f32 %v196, 0.0
  %v247 = vmax.f32 %v199, 0.0
  %v248 = vmax.f32 %v204, 0.0
  %v249 = vmax.f32 %v207, 0.0
  %v250 = vmax.f32 %v212, 0.0
  %v251 = vmax.f32 %v215, 0.0
  %v252 = vmax.f32 %v220, 0.0
  %v253 = vmax.f32 %v223, 0.0
  %v254 = vmax.f32 %v228, 0.0
  %v255 = vmax.f32 %v231, 0.0
  %v256 = vmax.f32 %v236, 0.0
  %v257 = vmax.f32 %v239, 0.0
  %v258 = vld [vmem:[%s1] sm:$0xf]
  %v259 = vpack.c.bf16 %v243, %v242
  %v260 = vpack.c.bf16 %v245, %v244
  %v261 = vpack.c.bf16 %v247, %v246
  %v262 = vpack.c.bf16 %v249, %v248
  %v263 = vpack.c.bf16 %v251, %v250
  %v264 = vpack.c.bf16 %v253, %v252
  %v265 = vpack.c.bf16 %v255, %v254
  %v266 = vpack.c.bf16 %v257, %v256
  %267 = vmatprep.subr.bf16.mxu0 0
  %268 = vmatpush1.bf16.msra.mxu0 %v266
  %269 = vmatprep.subr.bf16.mxu0 0
  %270 = vmatpush1.bf16.msra.mxu0 %v265
  %271 = vmatprep.subr.bf16.mxu0 0
  %272 = vmatpush1.bf16.msra.mxu0 %v264
  %273 = vmatprep.subr.bf16.mxu0 0
  %274 = vmatpush1.bf16.msra.mxu0 %v263
  %275 = vmatprep.subr.bf16.mxu0 0
  %276 = vmatpush1.bf16.msra.mxu0 %v262
  %277 = vmatprep.subr.bf16.mxu0 0
  %278 = vmatpush1.bf16.msra.mxu0 %v261
  %279 = vmatprep.subr.bf16.mxu0 0
  %280 = vmatpush1.bf16.msra.mxu0 %v260
  %281 = vmatprep.subr.bf16.mxu0 0
  %282 = vmatpush1.bf16.msra.mxu0 %v259
  %283 = vmatprep.subr.bf16.mxu0 0
  %284 = vmatpush2.bf16.msra.mxu0 0
  %285 = vmatprep.subr.bf16.mxu0 0
  %286 = vmatpush2.bf16.msra.mxu0 0
  %287 = vmatprep.subr.bf16.mxu0 0
  %288 = vmatpush2.bf16.msra.mxu0 0
  %289 = vmatprep.subr.bf16.mxu0 0
  %290 = vmatpush2.bf16.msra.mxu0 0
  %291 = vmatprep.subr.bf16.mxu0 0
  %292 = vmatpush2.bf16.msra.mxu0 0
  %293 = vmatprep.subr.bf16.mxu0 0
  %294 = vmatpush2.bf16.msra.mxu0 0
  %295 = vmatprep.subr.bf16.mxu0 0
  %296 = vmatpush2.bf16.msra.mxu0 0
  %297 = vmatprep.subr.bf16.mxu0 0
  %298 = vmatpush2.bf16.msra.mxu0 0
  %299 = vmatprep.mubr.bf16.mxu0 0
  %300 = vmatmul.mubr.bf16.gmra.mxu0 %v258
  %v301 = vpop.f32.mrf.mxu0
  %v302 = vadd.f32 0.0, %v301
  %v303 = vpop.f32.mrf.mxu0
  %v304 = vpop.f32.mrf.mxu0
  %v305 = vpop.f32.mrf.mxu0
  %306 = vdwg.mxu0
  %v307 = vpack.c.bf16 %v302, %v302
  %v308 = vld [vmem:[%s5] sm:$0xf]
  %v309 = vld [vmem:[%s5 + $0x4] sm:$0xf]
  %v310 = vld [vmem:[%s5 + $0x8] sm:$0xf]
  %v311 = vld [vmem:[%s5 + $0xc] sm:$0xf]
  %v312 = vld [vmem:[%s6] sm:$0x1]
  %v314 = vlaneseq
  %v315 = vshrl.u32 %v314, 7
  %v316 = vsub.s32 0, %v315
  %v317 = vrot.slane %v312, %v316
  %v323 = vunpack.c.l.b16 %v308
  %v324 = vunpack.c.l.b16 %v309
  %v325 = vunpack.c.l.b16 %v310
  %v326 = vunpack.c.l.b16 %v311
  %v327 = vpack.c.b16 %v324, %v323
  %v328 = vpack.c.b16 %v326, %v325
  %vm331 = vcmask 261120
  %v333 = vsel %vm331, %v307, 0
  %335 = vmatprep.subr.bf16.mxu0 0
  %336 = vmatpush1.bf16.msra.mxu0 0
  %337 = vmatprep.subr.bf16.mxu0 0
  %338 = vmatpush1.bf16.msra.mxu0 0
  %339 = vmatprep.subr.bf16.mxu0 0
  %340 = vmatpush1.bf16.msra.mxu0 0
  %341 = vmatprep.subr.bf16.mxu0 0
  %342 = vmatpush1.bf16.msra.mxu0 0
  %343 = vmatprep.subr.bf16.mxu0 0
  %344 = vmatpush1.bf16.msra.mxu0 0
  %345 = vmatprep.subr.bf16.mxu0 0
  %346 = vmatpush1.bf16.msra.mxu0 0
  %347 = vmatprep.subr.bf16.mxu0 0
  %348 = vmatpush1.bf16.msra.mxu0 %v328
  %349 = vmatprep.subr.bf16.mxu0 0
  %350 = vmatpush1.bf16.msra.mxu0 %v327
  %351 = vmatprep.subr.bf16.mxu0 0
  %352 = vmatpush2.bf16.msra.mxu0 0
  %353 = vmatprep.subr.bf16.mxu0 0
  %354 = vmatpush2.bf16.msra.mxu0 0
  %355 = vmatprep.subr.bf16.mxu0 0
  %356 = vmatpush2.bf16.msra.mxu0 0
  %357 = vmatprep.subr.bf16.mxu0 0
  %358 = vmatpush2.bf16.msra.mxu0 0
  %359 = vmatprep.subr.bf16.mxu0 0
  %360 = vmatpush2.bf16.msra.mxu0 0
  %361 = vmatprep.subr.bf16.mxu0 0
  %362 = vmatpush2.bf16.msra.mxu0 0
  %363 = vmatprep.subr.bf16.mxu0 0
  %364 = vmatpush2.bf16.msra.mxu0 0
  %365 = vmatprep.subr.bf16.mxu0 0
  %366 = vmatpush2.bf16.msra.mxu0 0
  %367 = vmatprep.mubr.bf16.mxu0 0
  %368 = vmatmul.mubr.bf16.gmra.mxu0 %v333
  %v369 = vpop.f32.mrf.mxu0
  %v370 = vadd.f32 %v317, %v369
  %v371 = vpop.f32.mrf.mxu0
  %v372 = vpop.f32.mrf.mxu0
  %v373 = vpop.f32.mrf.mxu0
  %374 = vdwg.mxu0
  %v375 = vmax.f32 %v370, 0.0
  %v376 = vpack.c.bf16 %v375, %v375
  %v377 = vld [vmem:[%s7] sm:$0xff]
  %v378 = vld [vmem:[%s7 + $0x8] sm:$0xff]
  %v379 = vld [vmem:[%s7 + $0x10] sm:$0xff]
  %v380 = vld [vmem:[%s7 + $0x18] sm:$0xff]
  %v381 = vld [vmem:[%s7 + $0x20] sm:$0xff]
  %v382 = vld [vmem:[%s7 + $0x28] sm:$0xff]
  %v383 = vld [vmem:[%s7 + $0x30] sm:$0xff]
  %v384 = vld [vmem:[%s7 + $0x38] sm:$0xff]
  %v385 = vld [vmem:[%s7 + $0x40] sm:$0xff]
  %v386 = vld [vmem:[%s7 + $0x48] sm:$0xff]
  %v387 = vld [vmem:[%s7 + $0x50] sm:$0xff]
  %v388 = vld [vmem:[%s7 + $0x58] sm:$0xff]
  %v389 = vld [vmem:[%s7 + $0x60] sm:$0xff]
  %v390 = vld [vmem:[%s7 + $0x68] sm:$0xff]
  %v391 = vld [vmem:[%s7 + $0x70] sm:$0xff]
  %v392 = vld [vmem:[%s7 + $0x78] sm:$0xff]
  %v393 = vld [vmem:[%s8] sm:$0xf]
  %v395 = vlaneseq
  %v396 = vshrl.u32 %v395, 7
  %v397 = vsub.s32 0, %v396
  %v398 = vrot.slane %v393, %v397
  %v399 = vlaneseq
  %v400 = vshrl.u32 %v399, 7
  %v401 = vsub.s32 1, %v400
  %v402 = vrot.slane %v393, %v401
  %v403 = vlaneseq
  %v404 = vshrl.u32 %v403, 7
  %v405 = vsub.s32 2, %v404
  %v406 = vrot.slane %v393, %v405
  %v407 = vlaneseq
  %v408 = vshrl.u32 %v407, 7
  %v409 = vsub.s32 3, %v408
  %v410 = vrot.slane %v393, %v409
  %v431 = vunpack.c.l.b16 %v377
  %v432 = vunpack.c.h.b16 %v377
  %v433 = vunpack.c.l.b16 %v378
  %v434 = vunpack.c.h.b16 %v378
  %v435 = vunpack.c.l.b16 %v379
  %v436 = vunpack.c.h.b16 %v379
  %v437 = vunpack.c.l.b16 %v380
  %v438 = vunpack.c.h.b16 %v380
  %v439 = vunpack.c.l.b16 %v381
  %v440 = vunpack.c.h.b16 %v381
  %v441 = vunpack.c.l.b16 %v382
  %v442 = vunpack.c.h.b16 %v382
  %v443 = vunpack.c.l.b16 %v383
  %v444 = vunpack.c.h.b16 %v383
  %v445 = vunpack.c.l.b16 %v384
  %v446 = vunpack.c.h.b16 %v384
  %v447 = vunpack.c.l.b16 %v385
  %v448 = vunpack.c.h.b16 %v385
  %v449 = vunpack.c.l.b16 %v386
  %v450 = vunpack.c.h.b16 %v386
  %v451 = vunpack.c.l.b16 %v387
  %v452 = vunpack.c.h.b16 %v387
  %v453 = vunpack.c.l.b16 %v388
  %v454 = vunpack.c.h.b16 %v388
  %v455 = vunpack.c.l.b16 %v389
  %v456 = vunpack.c.h.b16 %v389
  %v457 = vunpack.c.l.b16 %v390
  %v458 = vunpack.c.h.b16 %v390
  %v459 = vunpack.c.l.b16 %v391
  %v460 = vunpack.c.h.b16 %v391
  %v461 = vunpack.c.l.b16 %v392
  %v462 = vunpack.c.h.b16 %v392
  %v463 = vpack.c.b16 %v435, %v431
  %v464 = vpack.c.b16 %v436, %v432
  %v465 = vpack.c.b16 %v437, %v433
  %v466 = vpack.c.b16 %v438, %v434
  %v467 = vpack.c.b16 %v443, %v439
  %v468 = vpack.c.b16 %v444, %v440
  %v469 = vpack.c.b16 %v445, %v441
  %v470 = vpack.c.b16 %v446, %v442
  %v471 = vpack.c.b16 %v451, %v447
  %v472 = vpack.c.b16 %v452, %v448
  %v473 = vpack.c.b16 %v453, %v449
  %v474 = vpack.c.b16 %v454, %v450
  %v475 = vpack.c.b16 %v459, %v455
  %v476 = vpack.c.b16 %v460, %v456
  %v477 = vpack.c.b16 %v461, %v457
  %v478 = vpack.c.b16 %v462, %v458
  %vm495 = vcmask 523264
  %v497 = vsel %vm495, %v376, 0
  %499 = vmatprep.subr.bf16.mxu0 0
  %500 = vmatpush1.bf16.msra.mxu0 0
  %501 = vmatprep.subr.bf16.mxu0 0
  %502 = vmatpush1.bf16.msra.mxu0 0
  %503 = vmatprep.subr.bf16.mxu0 0
  %504 = vmatpush1.bf16.msra.mxu0 0
  %505 = vmatprep.subr.bf16.mxu0 0
  %506 = vmatpush1.bf16.msra.mxu0 0
  %507 = vmatprep.subr.bf16.mxu0 %v476
  %508 = vmatpush1.bf16.msra.mxu0 %v475
  %509 = vmatprep.subr.bf16.mxu0 %v472
  %510 = vmatpush1.bf16.msra.mxu0 %v471
  %511 = vmatprep.subr.bf16.mxu0 %v468
  %512 = vmatpush1.bf16.msra.mxu0 %v467
  %513 = vmatprep.subr.bf16.mxu0 %v464
  %514 = vmatpush1.bf16.msra.mxu0 %v463
  %515 = vmatprep.subr.bf16.mxu0 0
  %516 = vmatpush2.bf16.msra.mxu0 0
  %517 = vmatprep.subr.bf16.mxu0 0
  %518 = vmatpush2.bf16.msra.mxu0 0
  %519 = vmatprep.subr.bf16.mxu0 0
  %520 = vmatpush2.bf16.msra.mxu0 0
  %521 = vmatprep.subr.bf16.mxu0 0
  %522 = vmatpush2.bf16.msra.mxu0 0
  %523 = vmatprep.subr.bf16.mxu0 0
  %524 = vmatpush2.bf16.msra.mxu0 0
  %525 = vmatprep.subr.bf16.mxu0 0
  %526 = vmatpush2.bf16.msra.mxu0 0
  %527 = vmatprep.subr.bf16.mxu0 0
  %528 = vmatpush2.bf16.msra.mxu0 0
  %529 = vmatprep.subr.bf16.mxu0 0
  %530 = vmatpush2.bf16.msra.mxu0 0
  %531 = vmatprep.mubr.bf16.mxu0 0
  %532 = vmatmul.mubr.bf16.gmra.mxu0 %v497
  %v533 = vpop.f32.mrf.mxu0
  %v534 = vadd.f32 %v398, %v533
  %v535 = vpop.f32.mrf.mxu0
  %v536 = vadd.f32 %v402, %v535
  %v537 = vpop.f32.mrf.mxu0
  %v538 = vpop.f32.mrf.mxu0
  %539 = vdwg.mxu0
  %540 = vmatprep.subr.bf16.mxu0 0
  %541 = vmatpush1.bf16.msra.mxu0 0
  %542 = vmatprep.subr.bf16.mxu0 0
  %543 = vmatpush1.bf16.msra.mxu0 0
  %544 = vmatprep.subr.bf16.mxu0 0
  %545 = vmatpush1.bf16.msra.mxu0 0
  %546 = vmatprep.subr.bf16.mxu0 0
  %547 = vmatpush1.bf16.msra.mxu0 0
  %548 = vmatprep.subr.bf16.mxu0 %v478
  %549 = vmatpush1.bf16.msra.mxu0 %v477
  %550 = vmatprep.subr.bf16.mxu0 %v474
  %551 = vmatpush1.bf16.msra.mxu0 %v473
  %552 = vmatprep.subr.bf16.mxu0 %v470
  %553 = vmatpush1.bf16.msra.mxu0 %v469
  %554 = vmatprep.subr.bf16.mxu0 %v466
  %555 = vmatpush1.bf16.msra.mxu0 %v465
  %556 = vmatprep.subr.bf16.mxu0 0
  %557 = vmatpush2.bf16.msra.mxu0 0
  %558 = vmatprep.subr.bf16.mxu0 0
  %559 = vmatpush2.bf16.msra.mxu0 0
  %560 = vmatprep.subr.bf16.mxu0 0
  %561 = vmatpush2.bf16.msra.mxu0 0
  %562 = vmatprep.subr.bf16.mxu0 0
  %563 = vmatpush2.bf16.msra.mxu0 0
  %564 = vmatprep.subr.bf16.mxu0 0
  %565 = vmatpush2.bf16.msra.mxu0 0
  %566 = vmatprep.subr.bf16.mxu0 0
  %567 = vmatpush2.bf16.msra.mxu0 0
  %568 = vmatprep.subr.bf16.mxu0 0
  %569 = vmatpush2.bf16.msra.mxu0 0
  %570 = vmatprep.subr.bf16.mxu0 0
  %571 = vmatpush2.bf16.msra.mxu0 0
  %572 = vmatprep.mubr.bf16.mxu0 0
  %573 = vmatmul.mubr.bf16.gmra.mxu0 %v497
  %v574 = vpop.f32.mrf.mxu0
  %v575 = vadd.f32 %v406, %v574
  %v576 = vpop.f32.mrf.mxu0
  %v577 = vadd.f32 %v410, %v576
  %v578 = vpop.f32.mrf.mxu0
  %v579 = vpop.f32.mrf.mxu0
  %580 = vdwg.mxu0
  %v581 = vmul.f32 %v577, %v577
  %583 = vrot.lane.b32.xlu0 %v581, 127
  %v584 = vpop.permute.xlu0 %583
  %v586 = vadd.f32 %v581, %v584
  %587 = vrot.lane.b32.xlu0 %v581, 126
  %v588 = vpop.permute.xlu0 %587
  %v590 = vadd.f32 %v586, %v588
  %v591 = vadd.f32 %v590, 1e-08
  %v592 = vrsqrt.pop %v591
  %v593 = vmul.f32 %v591, %v592
  %v594 = vand.u32 2147483647, %v593
  %vm595 = vcmp.le.f32.partialorder %v594, 0.7853982
  %vm596 = vcmp.lt.s32.totalorder %v593, 0
  %v597 = vand.u32 %v593, 2139095040
  %v598 = vshrl.u32 %v597, 23
  %v599 = vsub.s32 %v598, 127
  %v600 = vand.u32 2147483647, %v593
  %v601 = vand.u32 %v600, 8388607
  %v602 = vor.u32 %v601, 8388608
  %v603 = vsub.s32 0, %v602
  %v604 = vadd.s32 %v599, 1
  %vm605 = vcmp.gt.s32.totalorder %v604, 0
  %v606 = vsel %vm605, %v604, 0
  %v607 = vshrl.u32 %v606, 5
  %v608 = vand.u32 %v606, 31
  %v609 = vsub.s32 32, %v608
  %v610 = vshrl.u32 683565275, %v609
  %v611 = vshll.u32 683565275, %v608
  %v612 = vshrl.u32 2475754826, %v609
  %v613 = vor.u32 %v611, %v612
  %v614 = vshll.u32 2475754826, %v608
  %v615 = vshrl.u32 2131351028, %v609
  %v616 = vor.u32 %v614, %v615
  %v617 = vshll.u32 2131351028, %v608
  %v618 = vshrl.u32 2102212464, %v609
  %v619 = vor.u32 %v617, %v618
  %v620 = vshll.u32 2102212464, %v608
  %v621 = vshrl.u32 920167782, %v609
  %v622 = vor.u32 %v620, %v621
  %v623 = vshll.u32 920167782, %v608
  %v624 = vshrl.u32 1326507024, %v609
  %v625 = vor.u32 %v623, %v624
  %vm626 = vcmp.lt.s32.totalorder %v607, 1
  %vm627 = vcmp.lt.s32.totalorder %v607, 2
  %vm628 = vcmp.lt.s32.totalorder %v607, 3
  %vm629 = vcmp.lt.s32.totalorder %v607, 4
  %v630 = vsel %vm626, %v610, %v613
  %v631 = vsel %vm629, %v619, 2102212464
  %v632 = vsel %vm628, %v616, %v631
  %v633 = vsel %vm627, %v630, %v632
  %v634 = vsel %vm626, %v613, %v616
  %v635 = vsel %vm629, %v622, 920167782
  %v636 = vsel %vm628, %v619, %v635
  %v637 = vsel %vm627, %v634, %v636
  %v638 = vsel %vm626, %v616, %v619
  %v639 = vsel %vm629, %v625, 1326507024
  %v640 = vsel %vm628, %v622, %v639
  %v641 = vsel %vm627, %v638, %v640
  %v642 = vshll.u32 %v602, 8
  %v643 = vmul.u32.u64.compose %v642, %v641
  %v644 = vextract.low.u32 %v643
  %v645 = vextract.high.u32 %v643
  %v646 = vmul.u32.u64.compose %v642, %v637
  %v647 = vextract.low.u32 %v646
  %v648 = vextract.high.u32 %v646
  %v649 = vmul.u32 %v642, %v633
  %v650 = vadd.s32 %v645, %v647
  %vm651 = vc.u32 %v645, %v647
  %v652 = vadd.s32 %v648, 1
  %v653 = vsel %vm651, %v652, %v648
  %v654 = vadd.s32 %v649, %v653
  %v655 = vadd.s32 %v654, 536870912
  %v656 = vshrl.u32 %v655, 30
  %v657 = vshll.u32 %v656, 30
  %v658 = vsub.s32 %v654, %v657
  %vm659 = vcmp.lt.s32.totalorder %v658, 0
  %v660 = vsub.s32 0, %v658
  %v661 = vsel %vm659, %v660, %v658
  %v662 = vclz %v661
  %v663 = vsub.s32 %v662, 2
  %vm664 = vcmp.gt.s32.totalorder 0, %v663
  %v665 = vsel %vm664, 0, %v663
  %v666 = vsub.s32 32, %v665
  %v667 = vshll.u32 %v658, %v665
  %v668 = vshrl.u32 %v650, %v666
  %v669 = vor.u32 %v667, %v668
  %v670 = vsub.s32 4294967266, %v665
  %v671 = vadd.s32 %v670, 127
  %v672 = vshll.u32 %v671, 23
  %v673 = vor.u32 4788187, %v672
  %v674 = vand.u32 2147483647, %v673
  %v676 = vcvt.s32.f32 %v669
  %v677 = vmul.f32 %v676, %v674
  %v678 = vxor.u32 %v677, 2147483648
  %v679 = vsel %vm596, %v678, %v677
  %v680 = vsub.s32 4, %v656
  %v681 = vsel %vm596, %v680, %v656
  %v682 = vsel %vm595, %v593, %v679
  %v683 = vsel %vm595, 0, %v681
  %v684 = vcosq.f32.pop %v682
  %v685 = vsinq.f32.pop %v682
  %vm686 = vweird.f32 %v593
  %v687 = vadd.s32 %v683, 3
  %v688 = vand.u32 %v687, 3
  %vm689 = vcmp.lt.s32.totalorder %v688, 2
  %vm690 = vcmp.eq.s32.totalorder %v688, 0
  %v691 = vxor.u32 %v685, 2147483648
  %v692 = vsel %vm690, %v684, %v691
  %vm693 = vcmp.eq.s32.totalorder %v688, 2
  %v694 = vxor.u32 %v684, 2147483648
  %v695 = vsel %vm693, %v694, %v685
  %v696 = vsel %vm689, %v692, %v695
  %v697 = vsel %vm686, nan, %v696
  %v698 = vand.u32 2147483647, %v593
  %vm699 = vcmp.le.f32.partialorder %v698, 0.7853982
  %vm700 = vcmp.lt.s32.totalorder %v593, 0
  %v701 = vand.u32 %v593, 2139095040
  %v702 = vshrl.u32 %v701, 23
  %v703 = vsub.s32 %v702, 127
  %v704 = vand.u32 2147483647, %v593
  %v705 = vand.u32 %v704, 8388607
  %v706 = vor.u32 %v705, 8388608
  %v707 = vsub.s32 0, %v706
  %v708 = vadd.s32 %v703, 1
  %vm709 = vcmp.gt.s32.totalorder %v708, 0
  %v710 = vsel %vm709, %v708, 0
  %v711 = vshrl.u32 %v710, 5
  %v712 = vand.u32 %v710, 31
  %v713 = vsub.s32 32, %v712
  %v714 = vshrl.u32 683565275, %v713
  %v715 = vshll.u32 683565275, %v712
  %v716 = vshrl.u32 2475754826, %v713
  %v717 = vor.u32 %v715, %v716
  %v718 = vshll.u32 2475754826, %v712
  %v719 = vshrl.u32 2131351028, %v713
  %v720 = vor.u32 %v718, %v719
  %v721 = vshll.u32 2131351028, %v712
  %v722 = vshrl.u32 2102212464, %v713
  %v723 = vor.u32 %v721, %v722
  %v724 = vshll.u32 2102212464, %v712
  %v725 = vshrl.u32 920167782, %v713
  %v726 = vor.u32 %v724, %v725
  %v727 = vshll.u32 920167782, %v712
  %v728 = vshrl.u32 1326507024, %v713
  %v729 = vor.u32 %v727, %v728
  %vm730 = vcmp.lt.s32.totalorder %v711, 1
  %vm731 = vcmp.lt.s32.totalorder %v711, 2
  %vm732 = vcmp.lt.s32.totalorder %v711, 3
  %vm733 = vcmp.lt.s32.totalorder %v711, 4
  %v734 = vsel %vm730, %v714, %v717
  %v735 = vsel %vm733, %v723, 2102212464
  %v736 = vsel %vm732, %v720, %v735
  %v737 = vsel %vm731, %v734, %v736
  %v738 = vsel %vm730, %v717, %v720
  %v739 = vsel %vm733, %v726, 920167782
  %v740 = vsel %vm732, %v723, %v739
  %v741 = vsel %vm731, %v738, %v740
  %v742 = vsel %vm730, %v720, %v723
  %v743 = vsel %vm733, %v729, 1326507024
  %v744 = vsel %vm732, %v726, %v743
  %v745 = vsel %vm731, %v742, %v744
  %v746 = vshll.u32 %v706, 8
  %v747 = vmul.u32.u64.compose %v746, %v745
  %v748 = vextract.low.u32 %v747
  %v749 = vextract.high.u32 %v747
  %v750 = vmul.u32.u64.compose %v746, %v741
  %v751 = vextract.low.u32 %v750
  %v752 = vextract.high.u32 %v750
  %v753 = vmul.u32 %v746, %v737
  %v754 = vadd.s32 %v749, %v751
  %vm755 = vc.u32 %v749, %v751
  %v756 = vadd.s32 %v752, 1
  %v757 = vsel %vm755, %v756, %v752
  %v758 = vadd.s32 %v753, %v757
  %v759 = vadd.s32 %v758, 536870912
  %v760 = vshrl.u32 %v759, 30
  %v761 = vshll.u32 %v760, 30
  %v762 = vsub.s32 %v758, %v761
  %vm763 = vcmp.lt.s32.totalorder %v762, 0
  %v764 = vsub.s32 0, %v762
  %v765 = vsel %vm763, %v764, %v762
  %v766 = vclz %v765
  %v767 = vsub.s32 %v766, 2
  %vm768 = vcmp.gt.s32.totalorder 0, %v767
  %v769 = vsel %vm768, 0, %v767
  %v770 = vsub.s32 32, %v769
  %v771 = vshll.u32 %v762, %v769
  %v772 = vshrl.u32 %v754, %v770
  %v773 = vor.u32 %v771, %v772
  %v774 = vsub.s32 4294967266, %v769
  %v775 = vadd.s32 %v774, 127
  %v776 = vshll.u32 %v775, 23
  %v777 = vor.u32 4788187, %v776
  %v778 = vand.u32 2147483647, %v777
  %v780 = vcvt.s32.f32 %v773
  %v781 = vmul.f32 %v780, %v778
  %v782 = vxor.u32 %v781, 2147483648
  %v783 = vsel %vm700, %v782, %v781
  %v784 = vsub.s32 4, %v760
  %v785 = vsel %vm700, %v784, %v760
  %v786 = vsel %vm699, %v593, %v783
  %v787 = vsel %vm699, 0, %v785
  %v788 = vcosq.f32.pop %v786
  %v789 = vsinq.f32.pop %v786
  %vm790 = vweird.f32 %v593
  %v791 = vand.u32 %v787, 3
  %vm792 = vcmp.lt.s32.totalorder %v791, 2
  %vm793 = vcmp.eq.s32.totalorder %v791, 0
  %v794 = vxor.u32 %v789, 2147483648
  %v795 = vsel %vm793, %v788, %v794
  %vm796 = vcmp.eq.s32.totalorder %v791, 2
  %v797 = vxor.u32 %v788, 2147483648
  %v798 = vsel %vm796, %v797, %v789
  %v799 = vsel %vm792, %v795, %v798
  %v800 = vsel %vm790, nan, %v799
  %v801 = vsub.f32 1.0, %v800
  %v802 = vmul.f32 %v577, %v592
  %804 = vrot.lane.b32.xlu0 %v592, 1
  %v805 = vpop.permute.xlu0 %804
  %v807 = vmul.f32 %v577, %v805
  %808 = vrot.lane.b32.xlu0 %v592, 2
  %v809 = vpop.permute.xlu0 %808
  %v811 = vmul.f32 %v577, %v809
  %813 = vset.pattern.permute.xlu0 0
  %814 = vperm.xlu0 %813, %v802
  %v815 = vpop.permute.xlu0 %814
  %v817 = vmul.f32 %v815, %v534
  %819 = vset.pattern.permute.xlu0 1
  %820 = vperm.xlu0 %819, %v807
  %v821 = vpop.permute.xlu0 %820
  %v823 = vmul.f32 %v821, %v536
  %v824 = vadd.f32 %v817, %v823
  %826 = vset.pattern.permute.xlu0 2
  %827 = vperm.xlu0 %826, %v811
  %v828 = vpop.permute.xlu0 %827
  %v830 = vmul.f32 %v828, %v575
  %v831 = vadd.f32 %v824, %v830
  %v832 = vmul.f32 %v821, %v575
  %v833 = vmul.f32 %v828, %v536
  %v834 = vsub.f32 %v832, %v833
  %v835 = vmul.f32 %v828, %v534
  %v836 = vmul.f32 %v815, %v575
  %v837 = vsub.f32 %v835, %v836
  %v838 = vmul.f32 %v815, %v536
  %v839 = vmul.f32 %v821, %v534
  %v840 = vsub.f32 %v838, %v839
  %842 = vset.pattern.permute.xlu0 0
  %843 = vperm.xlu0 %842, %v800
  %v844 = vpop.permute.xlu0 %843
  %v846 = vmul.f32 %v534, %v844
  %848 = vset.pattern.permute.xlu0 0
  %849 = vperm.xlu0 %848, %v697
  %v850 = vpop.permute.xlu0 %849
  %v852 = vmul.f32 %v834, %v850
  %v853 = vadd.f32 %v846, %v852
  %v854 = vmul.f32 %v815, %v831
  %856 = vset.pattern.permute.xlu0 0
  %857 = vperm.xlu0 %856, %v801
  %v858 = vpop.permute.xlu0 %857
  %v860 = vmul.f32 %v854, %v858
  %v861 = vadd.f32 %v853, %v860
  %v862 = vmul.f32 %v536, %v844
  %v863 = vmul.f32 %v837, %v850
  %v864 = vadd.f32 %v862, %v863
  %v865 = vmul.f32 %v821, %v831
  %v866 = vmul.f32 %v865, %v858
  %v867 = vadd.f32 %v864, %v866
  %v868 = vmul.f32 %v575, %v844
  %v869 = vmul.f32 %v840, %v850
  %v870 = vadd.f32 %v868, %v869
  %v871 = vmul.f32 %v828, %v831
  %v872 = vmul.f32 %v871, %v858
  %v873 = vadd.f32 %v870, %v872
  %v874 = vld [vmem:[%s2] sm:$0xff]
  %876 = vset.pattern.permute.xlu0 0
  %877 = vperm.xlu0 %876, %v874
  %v878 = vpop.permute.xlu0 %877
  %v880 = vmul.f32 %v878, %v861
  %881 = vset.pattern.permute.xlu0 1
  %882 = vperm.xlu0 %881, %v874
  %v883 = vpop.permute.xlu0 %882
  %v885 = vmul.f32 %v883, %v867
  %v886 = vadd.f32 %v880, %v885
  %887 = vset.pattern.permute.xlu0 2
  %888 = vperm.xlu0 %887, %v874
  %v889 = vpop.permute.xlu0 %888
  %v891 = vmul.f32 %v889, %v873
  %v892 = vadd.f32 %v886, %v891
  %893 = vset.pattern.permute.xlu0 3
  %894 = vperm.xlu0 %893, %v874
  %v895 = vpop.permute.xlu0 %894
  %v897 = vmul.f32 %v895, %v861
  %898 = vset.pattern.permute.xlu0 4
  %899 = vperm.xlu0 %898, %v874
  %v900 = vpop.permute.xlu0 %899
  %v902 = vmul.f32 %v900, %v867
  %v903 = vadd.f32 %v897, %v902
  %904 = vset.pattern.permute.xlu0 5
  %905 = vperm.xlu0 %904, %v874
  %v906 = vpop.permute.xlu0 %905
  %v908 = vmul.f32 %v906, %v873
  %v909 = vadd.f32 %v903, %v908
  %910 = vset.pattern.permute.xlu0 6
  %911 = vperm.xlu0 %910, %v874
  %v912 = vpop.permute.xlu0 %911
  %v914 = vmul.f32 %v912, %v861
  %915 = vset.pattern.permute.xlu0 7
  %916 = vperm.xlu0 %915, %v874
  %v917 = vpop.permute.xlu0 %916
  %v919 = vmul.f32 %v917, %v867
  %v920 = vadd.f32 %v914, %v919
  %921 = vset.pattern.permute.xlu0 8
  %922 = vperm.xlu0 %921, %v874
  %v923 = vpop.permute.xlu0 %922
  %v925 = vmul.f32 %v923, %v873
  %v926 = vadd.f32 %v920, %v925
  %v927 = vand.u32 2147483647, %v926
  %vm928 = vcmp.gt.f32.partialorder %v927, 1e-06
  %vm929 = vcmp.ge.f32.partialorder %v926, 0.0
  %v930 = vsel %vm929, 1e-06, -1e-06
  %v931 = vsel %vm928, %v926, %v930
  %v932 = vrcp.pop %v931
  %v933 = vmul.f32 %v892, %v932
  %v934 = vmul.f32 %v909, %v932
  %935 = vst [vmem:[%s9] sm:$0xff] %v861
  %s936 = scalar_lea.vmem %s9, 8
  %937 = vst [vmem:[%s936] sm:$0xff] %v867
  %s938 = scalar_lea.vmem %s9, 16
  %939 = vst [vmem:[%s938] sm:$0xff] %v873
  %s940 = scalar_lea.vmem %s9, 24
  %941 = vst [vmem:[%s940] sm:$0xff] %v933
  %s942 = scalar_lea.vmem %s9, 32
  %943 = vst [vmem:[%s942] sm:$0xff] %v934
  // Predicated region
  $region38: #{mano3d_handpose_forward.1} parent=0 // pred_check
    _
  $region39: #{mano3d_handpose_forward.1} parent=0 // pred_check_branch
    %945 = sbr.rel (0) target = $region41
  $region40: #{mano3d_handpose_forward.1} parent=0 // pred_region
    _
  $region41: #{mano3d_handpose_forward.1} parent=0 // pred_fallthru
    _
  // Predicated region
  $region42: #{mano3d_handpose_forward.1} parent=0 // pred_check
    _
  $region43: #{mano3d_handpose_forward.1} parent=0 // pred_check_branch
    %947 = sbr.rel (0) target = $region45
  $region44: #{mano3d_handpose_forward.1} parent=0 // pred_region
    _
  $region45: #{mano3d_handpose_forward.1} parent=0 // pred_fallthru
    _

</llo_original>
